<compile_context>
chip_gen: v5e
topology: v5e:2x2
jax: 0.10.0
libtpu: 0.0.40
codegen_flags: <defaults>
</compile_context>

<pallas_src>
import functools
import math

import jax
import jax.numpy as jnp
from jax.experimental import pallas as pl
from jax.experimental.pallas import tpu as pltpu

HIDDEN = 128      # hidden width of the DQN
OBS_PAD = 128     # n_observations (+ 1.0 bias column) padded to a full lane width
OUT_PAD = 128     # n_actions padded to a full lane width (lane-dense store)
TB_MAX = 2048     # max batch-tile rows (~3 MiB VMEM incl. double buffers)


def _round_up(x, m):
    return ((x + m - 1) // m) * m


def _choose_tiling(batch):
    """Pick (tile_rows, n_steps):
       * small batches -> one step (latency-bound acting loop),
       * large batches -> >=2 balanced steps so v7x's 2 TensorCores can both
         work the "parallel" batch axis (v5e/v6e simply run them back-to-back),
       * tile rows are a multiple of 16 (bf16 sublane tile); padding waste is
         bounded by 16 * n_steps rows."""
    b16 = _round_up(batch, 16)
    if b16 <= 256:
        return b16, 1
    n_steps = max(2, _round_up(-(-b16 // TB_MAX), 2))
    tile = _round_up(-(-batch // n_steps), 16)
    return tile, n_steps


def dqn_kernel(x_ref, w1_ref, w2_ref, w3_ref, b_ref, o_ref):
    # x_ref : (TB, OBS_PAD)      bf16  batch tile; col n_obs is 1.0 (bias fold)
    # w1_ref: (OBS_PAD, HIDDEN)  bf16  row n_obs holds b1 (VMEM-resident)
    # w2_ref: (HIDDEN, HIDDEN)   bf16  (VMEM-resident)
    # w3_ref: (HIDDEN, OUT_PAD)  bf16  zero-padded cols beyond n_actions
    # b_ref : (8, OUT_PAD)       f32   row 0 = b2, row 1 = b3
    # o_ref : (TB, OUT_PAD)      bf16  lane-dense output slab
    b2 = b_ref[0:1, :]
    b3 = b_ref[1:2, :]

    # layer1: Linear(n_obs -> 128) + ReLU (b1 folded into w1 via the 1.0 col)
    h = jnp.dot(x_ref[...], w1_ref[...], preferred_element_type=jnp.float32)
    h = jnp.maximum(h, 0.0)
    # layer2: Linear(128 -> 128) + ReLU
    h = jnp.dot(h.astype(jnp.bfloat16), w2_ref[...],
                preferred_element_type=jnp.float32)
    h = jnp.maximum(h + b2, 0.0)
    # layer3: Linear(128 -> n_actions), no activation (softmax unused in forward)
    h = jnp.dot(h.astype(jnp.bfloat16), w3_ref[...],
                preferred_element_type=jnp.float32)
    o_ref[...] = (h + b3).astype(o_ref.dtype)


def pack_dqn_params(params, n_observations, n_actions):
    """One-time repack of logical params into kernel-friendly padded/bf16 form."""
    # Bias-pack rows are OUT_PAD wide; these asserts keep a future change to
    # HIDDEN / n_actions from silently truncating biases.
    assert HIDDEN <= OUT_PAD, "b2 row would be truncated"
    assert n_actions <= OUT_PAD, "b3 row would be truncated"
    assert n_observations + 1 <= OBS_PAD, "no room for the folded-bias column"

    w1, b1 = params["w1"], params["b1"]
    w2, b2 = params["w2"], params["b2"]
    w3, b3 = params["w3"], params["b3"]

    w1p = jnp.zeros((OBS_PAD, HIDDEN), jnp.float32)
    w1p = w1p.at[:n_observations, :].set(w1)
    w1p = w1p.at[n_observations, :].set(b1.reshape(-1))     # folded b1 row
    w1p = w1p.astype(jnp.bfloat16)
    w2p = w2.astype(jnp.bfloat16)
    w3p = jnp.zeros((HIDDEN, OUT_PAD), jnp.float32)
    w3p = w3p.at[:, :n_actions].set(w3).astype(jnp.bfloat16)

    bpack = jnp.zeros((8, OUT_PAD), jnp.float32)
    bpack = bpack.at[0, :HIDDEN].set(b2.reshape(-1))
    bpack = bpack.at[1, :n_actions].set(b3.reshape(-1))

    return {"w1": w1p, "w2": w2p, "w3": w3p, "b": bpack}


@functools.partial(jax.jit, static_argnames=("n_actions",))
def dqn_forward(x, packed, *, n_actions):
    """x: (B, n_obs) float32.  packed: output of pack_dqn_params."""
    B, n_obs = x.shape
    TB, n_steps = _choose_tiling(B)
    B_pad = TB * n_steps

    # Append the 1.0 bias-fold column, zero-pad features to OBS_PAD lanes and
    # batch to B_pad rows, cast to bf16.  With allow_input_fusion below, XLA
    # may fuse this producer straight into the kernel's input stream instead
    # of materializing x_pad in HBM.
    ones = jnp.ones((B, 1), x.dtype)
    x_aug = jnp.concatenate([x, ones], axis=1)                      # (B, n_obs+1)
    x_pad = jnp.pad(x_aug, ((0, B_pad - B), (0, OBS_PAD - (n_obs + 1))))
    x_pad = x_pad.astype(jnp.bfloat16)

    flops = 2 * B_pad * (OBS_PAD * HIDDEN + HIDDEN * HIDDEN + HIDDEN * OUT_PAD)
    bytes_accessed = (
        x_pad.size * 2
        + packed["w1"].size * 2 + packed["w2"].size * 2 + packed["w3"].size * 2
        + packed["b"].size * 4
        + B_pad * OUT_PAD * 2                                       # bf16 output slab
    )

    out = pl.pallas_call(
        dqn_kernel,
        out_shape=jax.ShapeDtypeStruct((B_pad, OUT_PAD), jnp.bfloat16),
        grid_spec=pltpu.PrefetchScalarGridSpec(
            num_scalar_prefetch=0,
            grid=(n_steps,),
            in_specs=[
                pl.BlockSpec((TB, OBS_PAD), lambda i: (i, 0)),       # x tile
                pl.BlockSpec((OBS_PAD, HIDDEN), lambda i: (0, 0)),   # w1 (resident)
                pl.BlockSpec((HIDDEN, HIDDEN), lambda i: (0, 0)),    # w2 (resident)
                pl.BlockSpec((HIDDEN, OUT_PAD), lambda i: (0, 0)),   # w3 (resident)
                pl.BlockSpec((8, OUT_PAD), lambda i: (0, 0)),        # b2/b3 pack
            ],
            out_specs=pl.BlockSpec((TB, OUT_PAD), lambda i: (i, 0)),
        ),
        compiler_params=pltpu.CompilerParams(
            dimension_semantics=("parallel",),   # shard batch tiles across TCs (v7x)
            allow_input_fusion=[True, False, False, False, False],
        ),
        cost_estimate=pl.CostEstimate(
            flops=flops, transcendentals=0, bytes_accessed=bytes_accessed),
    )(x_pad, packed["w1"], packed["w2"], packed["w3"], packed["b"])

    # Slice the lane-dense bf16 slab back to the logical (B, n_actions) f32 result.
    return out[:B, :n_actions].astype(jnp.float32)


def init_dqn_params(key, n_observations, n_actions):
    """Deterministic init matching torch.nn.Linear default:
    U(-1/sqrt(fan_in), 1/sqrt(fan_in)) for both weight and bias.
    Weights stored as (in, out), i.e. transposed vs. PyTorch's (out, in)."""
    def linear(key, fan_in, fan_out):
        kw, kb = jax.random.split(key)
        bound = 1.0 / math.sqrt(fan_in)
        w = jax.random.uniform(kw, (fan_in, fan_out), jnp.float32, -bound, bound)
        b = jax.random.uniform(kb, (1, fan_out), jnp.float32, -bound, bound)
        return w, b

    k1, k2, k3 = jax.random.split(key, 3)
    w1, b1 = linear(k1, n_observations, 128)
    w2, b2 = linear(k2, 128, 128)
    w3, b3 = linear(k3, 128, n_actions)
    return {"w1": w1, "b1": b1, "w2": w2, "b2": b2, "w3": w3, "b3": b3}


def _ref_forward_f32(x, params):
    h = jnp.maximum(x @ params["w1"] + params["b1"], 0.0)
    h = jnp.maximum(h @ params["w2"] + params["b2"], 0.0)
    return h @ params["w3"] + params["b3"]


if __name__ == "__main__":
    n_observations = 5   # as in the module
    n_actions = 4        # env.action_space.n — synthetic choice
    batch = 8            # small acting-loop batch

    key = jax.random.PRNGKey(0)
    kp, kx, kx2 = jax.random.split(key, 3)
    params = init_dqn_params(kp, n_observations, n_actions)
    packed = pack_dqn_params(params, n_observations, n_actions)

    # --- small batch (single grid step) ---
    x = jax.random.normal(kx, (batch, n_observations), jnp.float32)
    out = dqn_forward(x, packed, n_actions=n_actions)
    out = jax.block_until_ready(out)
    ref = _ref_forward_f32(x, params)
    assert out.shape == (batch, n_actions)
    # bf16 matmul inputs + bf16 output slab -> loosened tolerance vs. pure f32.
    assert jnp.allclose(out, ref, atol=5e-2, rtol=5e-2), (
        float(jnp.max(jnp.abs(out - ref))))

    # --- larger batch (exercises the 2-step balanced grid, tight batch
    #     padding and the parallel grid axis) ---
    batch2 = 600
    x2 = jax.random.normal(kx2, (batch2, n_observations), jnp.float32)
    out2 = dqn_forward(x2, packed, n_actions=n_actions)
    out2 = jax.block_until_ready(out2)
    ref2 = _ref_forward_f32(x2, params)
    assert out2.shape == (batch2, n_actions)
    assert jnp.allclose(out2, ref2, atol=5e-2, rtol=5e-2), (
        float(jnp.max(jnp.abs(out2 - ref2))))

    # TODO(synk): self.softmax is defined in the PyTorch module but never used
    # in forward(), so it is intentionally not implemented in the kernel.
    print("KERNEL_OK")
</pallas_src>

<mosaic_0001>
module attributes {stable_mosaic.version = 11 : i64} {
  func.func @dqn_kernel(%arg0: i32, %arg1: memref<16x128xbf16, #tpu.memory_space<vmem>>, %arg2: memref<128x128xbf16, #tpu.memory_space<vmem>>, %arg3: memref<128x128xbf16, #tpu.memory_space<vmem>>, %arg4: memref<128x128xbf16, #tpu.memory_space<vmem>>, %arg5: memref<8x128xf32, #tpu.memory_space<vmem>>, %arg6: memref<16x128xbf16, #tpu.memory_space<vmem>>) attributes {dimension_semantics = [#tpu.dimension_semantics<parallel>], iteration_bounds = array<i64: 1>, scalar_prefetch = 0 : i64, scratch_operands = 0 : i64, tpu.core_type = #tpu.core_type<tc>, window_params = [{transform_indices = @transform_0, window_bounds = array<i64: 16, 128>}, {pipeline_mode = #tpu.pipeline_mode<synchronous>, transform_indices = @transform_1, window_bounds = array<i64: 128, 128>}, {pipeline_mode = #tpu.pipeline_mode<synchronous>, transform_indices = @transform_2, window_bounds = array<i64: 128, 128>}, {pipeline_mode = #tpu.pipeline_mode<synchronous>, transform_indices = @transform_3, window_bounds = array<i64: 128, 128>}, {pipeline_mode = #tpu.pipeline_mode<synchronous>, transform_indices = @transform_4, window_bounds = array<i64: 8, 128>}, {transform_indices = @transform_5, window_bounds = array<i64: 16, 128>}]} {
    %c0 = arith.constant 0 : index
    %c0_0 = arith.constant 0 : index
    %0 = vector.load %arg5[%c0, %c0_0] : memref<8x128xf32, #tpu.memory_space<vmem>>, vector<1x128xf32>
    %c1 = arith.constant 1 : index
    %c0_1 = arith.constant 0 : index
    %1 = vector.load %arg5[%c1, %c0_1] : memref<8x128xf32, #tpu.memory_space<vmem>>, vector<1x128xf32>
    %c0_2 = arith.constant 0 : index
    %c0_3 = arith.constant 0 : index
    %2 = vector.load %arg1[%c0_2, %c0_3] : memref<16x128xbf16, #tpu.memory_space<vmem>>, vector<16x128xbf16>
    %c0_4 = arith.constant 0 : index
    %c0_5 = arith.constant 0 : index
    %3 = vector.load %arg2[%c0_4, %c0_5] : memref<128x128xbf16, #tpu.memory_space<vmem>>, vector<128x128xbf16>
    %cst = arith.constant dense<0.000000e+00> : vector<16x128xf32>
    %4 = tpu.matmul %2, %3, %cst {dimension_numbers = #tpu.dot_dimension_numbers<[1], [0], [0], [1], [0, 0, 1, 1], [], []>} : vector<16x128xbf16>, vector<128x128xbf16>, vector<16x128xf32> -> vector<16x128xf32>
    %cst_6 = arith.constant 0.000000e+00 : f32
    %5 = vector.broadcast %cst_6 : f32 to vector<16x128xf32>
    %6 = arith.maximumf %4, %5 : vector<16x128xf32>
    %7 = arith.truncf %6 : vector<16x128xf32> to vector<16x128xbf16>
    %c0_7 = arith.constant 0 : index
    %c0_8 = arith.constant 0 : index
    %8 = vector.load %arg3[%c0_7, %c0_8] : memref<128x128xbf16, #tpu.memory_space<vmem>>, vector<128x128xbf16>
    %cst_9 = arith.constant dense<0.000000e+00> : vector<16x128xf32>
    %9 = tpu.matmul %7, %8, %cst_9 {dimension_numbers = #tpu.dot_dimension_numbers<[1], [0], [0], [1], [0, 0, 1, 1], [], []>} : vector<16x128xbf16>, vector<128x128xbf16>, vector<16x128xf32> -> vector<16x128xf32>
    %10 = vector.broadcast %0 : vector<1x128xf32> to vector<16x128xf32>
    %11 = arith.addf %9, %10 : vector<16x128xf32>
    %cst_10 = arith.constant 0.000000e+00 : f32
    %12 = vector.broadcast %cst_10 : f32 to vector<16x128xf32>
    %13 = arith.maximumf %11, %12 : vector<16x128xf32>
    %14 = arith.truncf %13 : vector<16x128xf32> to vector<16x128xbf16>
    %c0_11 = arith.constant 0 : index
    %c0_12 = arith.constant 0 : index
    %15 = vector.load %arg4[%c0_11, %c0_12] : memref<128x128xbf16, #tpu.memory_space<vmem>>, vector<128x128xbf16>
    %cst_13 = arith.constant dense<0.000000e+00> : vector<16x128xf32>
    %16 = tpu.matmul %14, %15, %cst_13 {dimension_numbers = #tpu.dot_dimension_numbers<[1], [0], [0], [1], [0, 0, 1, 1], [], []>} : vector<16x128xbf16>, vector<128x128xbf16>, vector<16x128xf32> -> vector<16x128xf32>
    %17 = vector.broadcast %1 : vector<1x128xf32> to vector<16x128xf32>
    %18 = arith.addf %16, %17 : vector<16x128xf32>
    %19 = arith.truncf %18 : vector<16x128xf32> to vector<16x128xbf16>
    %c0_14 = arith.constant 0 : index
    %c0_15 = arith.constant 0 : index
    %20 = vector.load %arg6[%c0_14, %c0_15] : memref<16x128xbf16, #tpu.memory_space<vmem>>, vector<16x128xbf16>
    tpu.vector_store %arg6[%c0_14, %c0_15], %19 {strides = array<i32>} : memref<16x128xbf16, #tpu.memory_space<vmem>>, vector<16x128xbf16>,
    return
  }
  func.func @transform_0(%arg0: i32) -> (i32, i32) {
    %c0_i32 = arith.constant 0 : i32
    %c0_i32_0 = arith.constant 0 : i32
    return %arg0, %c0_i32 : i32, i32
  }
  func.func @transform_1(%arg0: i32) -> (i32, i32) {
    %c0_i32 = arith.constant 0 : i32
    %c0_i32_0 = arith.constant 0 : i32
    %c0_i32_1 = arith.constant 0 : i32
    return %c0_i32, %c0_i32_0 : i32, i32
  }
  func.func @transform_2(%arg0: i32) -> (i32, i32) {
    %c0_i32 = arith.constant 0 : i32
    %c0_i32_0 = arith.constant 0 : i32
    %c0_i32_1 = arith.constant 0 : i32
    return %c0_i32, %c0_i32_0 : i32, i32
  }
  func.func @transform_3(%arg0: i32) -> (i32, i32) {
    %c0_i32 = arith.constant 0 : i32
    %c0_i32_0 = arith.constant 0 : i32
    %c0_i32_1 = arith.constant 0 : i32
    return %c0_i32, %c0_i32_0 : i32, i32
  }
  func.func @transform_4(%arg0: i32) -> (i32, i32) {
    %c0_i32 = arith.constant 0 : i32
    %c0_i32_0 = arith.constant 0 : i32
    %c0_i32_1 = arith.constant 0 : i32
    return %c0_i32, %c0_i32_0 : i32, i32
  }
  func.func @transform_5(%arg0: i32) -> (i32, i32) {
    %c0_i32 = arith.constant 0 : i32
    %c0_i32_0 = arith.constant 0 : i32
    return %arg0, %c0_i32 : i32, i32
  }
}

</mosaic_0001>

<llo_original>
// kernel: dqn_forward.2
$region0: #{dqn_forward.2}
  #allocation0 [shape = 'u32[]', space=smem, size = 0x4, offset = 0x4, fixed_abs, tag = 'smem constant byte address 0x4 - core index']
  #allocation1 [shape = 'u32[72,128]{1,0:T(1,128)}', space=vmem, size = 0x9000, scoped, tag = 'internal scratch']
  #allocation2 [shape = 'u32[2048]{0}', space=vmem, size = 0x2000, scoped, tag = 'scoped memory for dqn_forward.2']
  #allocation3 [shape = 'u32[2048]{0}', space=vmem, size = 0x2000, scoped, tag = 'scoped memory for dqn_forward.2']
  #allocation4 [shape = 'u32[2048]{0}', space=vmem, size = 0x2000, scoped, tag = 'scoped memory for dqn_forward.2']
  #allocation5 [shape = 'u32[2048]{0}', space=vmem, size = 0x2000, scoped, tag = 'scoped memory for dqn_forward.2']
  #allocation6 [shape = 'u32[2048]{0}', space=vmem, size = 0x2000, scoped, tag = 'scoped memory for dqn_forward.2']
  %s0 = inlined_call_operand.hbm [shape: bf16[128,128], index: 0, kind: input, shape index: {}]
  %s1 = inlined_call_operand.hbm [shape: bf16[128,128], index: 1, kind: input, shape index: {}]
  %s2 = inlined_call_operand.hbm [shape: bf16[128,128], index: 2, kind: input, shape index: {}]
  %s3 = inlined_call_operand.vmem [shape: f32[8,128], index: 3, kind: input, shape index: {}]
  %s4 = inlined_call_operand.<no memory space> [shape: s32[], index: 4, kind: input, shape index: {}]
  %s5 = inlined_call_operand.<no memory space> [shape: s32[], index: 5, kind: input, shape index: {}]
  %s6 = inlined_call_operand.vmem [shape: bf16[8,5], index: 6, kind: input, shape index: {}]
  %s7 = inlined_call_operand.<no memory space> [shape: bf16[], index: 7, kind: input, shape index: {}]
  %s8 = inlined_call_operand.<no memory space> [shape: bf16[], index: 8, kind: input, shape index: {}]
  %s9 = inlined_call_operand.vmem [shape: bf16[16,128], index: 9, kind: output, shape index: {}]
  %s10 = sld [smem:[#allocation0]]
  $region42: #{dqn_forward.2} parent=0
    _
  %s12 = ssub.s32 1, %s10
  %s13 = scalar_select 0, %s12, %s10
  %v14 = vstv %s4
  %v15 = vstv %s5
  %v16 = vstv %s7
  %v17 = vunpack.i.l.bf16 %v16
  %v19 = vunpack.i.h.bf16 %v16
  %v21 = vstv %s8
  %v22 = vunpack.i.l.bf16 %v21
  %v24 = vunpack.i.h.bf16 %v21
  $region1: #{dqn_forward.2} parent=0
    #allocation7 [shape = 'u8[32768]{0}', space=vmem, size = 0x8000, scoped, tag = 'input window, operand 1, single buffered']
    #allocation8 [shape = 's32[1]{0}', space=sflag, size = 0x4, scoped, tag = 'scoped memory for dqn_forward.2']
    #allocation9 [shape = 'u8[32768]{0}', space=vmem, size = 0x8000, scoped, tag = 'input window, operand 2, single buffered']
    #allocation10 [shape = 's32[1]{0}', space=sflag, size = 0x4, scoped, tag = 'scoped memory for dqn_forward.2']
    #allocation11 [shape = 'u8[32768]{0}', space=vmem, size = 0x8000, scoped, tag = 'input window, operand 3, single buffered']
    #allocation12 [shape = 'u8[4096]{0}', space=vmem, size = 0x1000, dematerialized = true, scoped, tag = 'FusionAdapter Buffer %fusion.4 = bf16[16,128]{1,0:T(8,128)(2,1)} fusion(%param_4.8, %param_5.4, %param_6.5, %param_7.5, %param_8.1), kind=kLoop, calls=%fused_computation.4.clone.clone, metadata={op_name="jit(dqn_forward)/jit(_pad)/pad" stack_frame_id=8}']
    %26 = vsyncpa [#allocation8], 0
    %27 = vsyncpa [#allocation10], 0
    // Predicated region
    $region2: #{dqn_forward.2} parent=1 // pred_check
      _
    $region3: #{dqn_forward.2} parent=1 // pred_check_branch
      %29 = sbr.rel (0) target = $region5
    $region4: #{dqn_forward.2} parent=1 // pred_region
      _
    $region5: #{dqn_forward.2} parent=1 // pred_fallthru
      _
    // Predicated region
    $region6: #{dqn_forward.2} parent=1 // pred_check
      _
    $region7: #{dqn_forward.2} parent=1 // pred_check_branch
      %31 = sbr.rel (0) target = $region9
    $region8: #{dqn_forward.2} parent=1 // pred_region
      %33 = vsyncadd [#allocation8], 0
      %s34 = sshll.u32 %s0, 4
      %s35 = int_to_ptr.hbm [resolvable:$true] %s34
      %s36 = sshll.u32 [#allocation7], 4
      %s37 = int_to_ptr.vmem [resolvable:$true] %s36
      %42 = dma.hbm_to_vmem [thread:$0]  %s35, 1024, %s37, [#allocation8], 64, 64, 4
    $region9: #{dqn_forward.2} parent=1 // pred_fallthru
      _
    // Predicated region
    $region10: #{dqn_forward.2} parent=1 // pred_check
      _
    $region11: #{dqn_forward.2} parent=1 // pred_check_branch
      %44 = sbr.rel (0) target = $region13
    $region12: #{dqn_forward.2} parent=1 // pred_region
      %46 = vsyncadd [#allocation10], 0
      %s47 = sshll.u32 %s1, 4
      %s48 = int_to_ptr.hbm [resolvable:$true] %s47
      %s49 = sshll.u32 [#allocation9], 4
      %s50 = int_to_ptr.vmem [resolvable:$true] %s49
      %55 = dma.hbm_to_vmem [thread:$0]  %s48, 1024, %s50, [#allocation10], 64, 64, 4
    $region13: #{dqn_forward.2} parent=1 // pred_fallthru
      _
    // Predicated region
    $region14: #{dqn_forward.2} parent=1 // pred_check
      _
    $region15: #{dqn_forward.2} parent=1 // pred_check_branch
      %57 = sbr.rel (0) target = $region17
    $region16: #{dqn_forward.2} parent=1 // pred_region
      %59 = vsyncadd [#allocation10], 0
      %s60 = sshll.u32 %s2, 4
      %s61 = int_to_ptr.hbm [resolvable:$true] %s60
      %s62 = sshll.u32 [#allocation11], 4
      %s63 = int_to_ptr.vmem [resolvable:$true] %s62
      %68 = dma.hbm_to_vmem [thread:$0]  %s61, 1024, %s63, [#allocation10], 64, 64, 4
    $region17: #{dqn_forward.2} parent=1 // pred_fallthru
      _
    // Predicated region
    $region18: #{dqn_forward.2} parent=1 // pred_check
      _
    $region19: #{dqn_forward.2} parent=1 // pred_check_branch
      %70 = sbr.rel (0) target = $region21
    $region20: #{dqn_forward.2} parent=1 // pred_region
      _
    $region21: #{dqn_forward.2} parent=1 // pred_fallthru
      _
    // Predicated region
    $region22: #{dqn_forward.2} parent=1 // pred_check
      _
    $region23: #{dqn_forward.2} parent=1 // pred_check_branch
      %72 = sbr.rel (0) target = $region25
    $region24: #{dqn_forward.2} parent=1 // pred_region
      %74 = dma.done [#allocation8], 1024
    $region25: #{dqn_forward.2} parent=1 // pred_fallthru
      _
    // Predicated region
    $region26: #{dqn_forward.2} parent=1 // pred_check
      _
    $region27: #{dqn_forward.2} parent=1 // pred_check_branch
      %76 = sbr.rel (0) target = $region29
    $region28: #{dqn_forward.2} parent=1 // pred_region
      %78 = dma.done [#allocation10], 1024
    $region29: #{dqn_forward.2} parent=1 // pred_fallthru
      _
    // Predicated region
    $region30: #{dqn_forward.2} parent=1 // pred_check
      _
    $region31: #{dqn_forward.2} parent=1 // pred_check_branch
      %80 = sbr.rel (0) target = $region33
    $region32: #{dqn_forward.2} parent=1 // pred_region
      %82 = dma.done [#allocation10], 1024
    $region33: #{dqn_forward.2} parent=1 // pred_fallthru
      _
    %s84 = sor.u32 255, 127
    %s85 = sand.u32 %s84, 85
    %s86 = sshrl.u32 %s85, 1
    %s87 = sor.u32 %s85, %s86
    %s88 = sand.u32 51, %s87
    %s89 = sshrl.u32 %s88, 2
    %s90 = sor.u32 %s88, %s89
    %s91 = sand.u32 15, %s90
    %v92 = vld [vmem:[%s6] sm:%s91]
    %v93 = vunpack.c.l.bf16 %v92
    %v94 = vunpack.c.h.bf16 %v92
    %v95 = vlaneseq
    %v96 = vand.u32 %v95, 127
    %vm98 = vcmp.lt.s32.totalorder %v96, 5
    %v99 = vsel %vm98, %v93, %v17
    %v100 = vlaneseq
    %v101 = vshrl.u32 %v100, 7
    %104 = xla_tuple %v101, %v15
    %105 = xla_tuple %104
    %vm106 = vcmp.lt.s32.totalorder %v101, %v15
    %v107 = vsel %vm106, 1, 0
    %108 = xla_tuple %v107
    %v109 = vlaneseq
    %v110 = vand.u32 %v109, 127
    %113 = xla_tuple %v110, %v14
    %114 = xla_tuple %113
    %vm115 = vcmp.lt.s32.totalorder %v110, %v14
    %v116 = vsel %vm115, 1, 0
    %117 = xla_tuple %v116
    %v118 = vand.u32 %v107, %v116
    %119 = xla_tuple %v107, %v99, %v22
    %120 = xla_tuple %119
    %v121 = vsel %vm106, %v99, %v22
    %122 = xla_tuple %v121
    %123 = xla_tuple %v118, %v121, %v22
    %124 = xla_tuple %123
    %vm125 = vcmp.ne.s32.totalorder %v118, 0
    %v126 = vsel %vm125, %v121, %v22
    %127 = xla_tuple %v126
    %v128 = vpack.c.bf16 0.0, %v126
    %s130 = ssub.s32 16, 1
    %131 = vst [vmem:[#allocation12] sm:%s130] %v128
    %v132 = vlaneseq
    %v133 = vshrl.u32 %v132, 7
    %v135 = vadd.s32 %v133, 8
    %136 = xla_tuple %v135, %v15
    %137 = xla_tuple %136
    %vm138 = vcmp.lt.s32.totalorder %v135, %v15
    %v139 = vsel %vm138, 1, 0
    %140 = xla_tuple %v139
    %v141 = vlaneseq
    %v142 = vand.u32 %v141, 127
    %145 = xla_tuple %v142, %v14
    %146 = xla_tuple %145
    %vm147 = vcmp.lt.s32.totalorder %v142, %v14
    %v148 = vsel %vm147, 1, 0
    %149 = xla_tuple %v148
    %v150 = vand.u32 %v139, %v148
    %151 = xla_tuple %v139, %v17, %v22
    %152 = xla_tuple %151
    %v153 = vsel %vm138, %v17, %v22
    %154 = xla_tuple %v153
    %155 = xla_tuple %v150, %v153, %v22
    %156 = xla_tuple %155
    %vm157 = vcmp.ne.s32.totalorder %v150, 0
    %v158 = vsel %vm157, %v153, %v22
    %159 = xla_tuple %v158
    %s160 = scalar_lea.vmem [#allocation12], 4
    %v161 = vpack.c.bf16 0.0, %v158
    %s163 = ssub.s32 16, 1
    %164 = vst [vmem:[%s160] sm:%s163] %v161
    %v165 = vld [vmem:[%s3] sm:$0x1]
    %v166 = vld [vmem:[%s3 + $0x1] sm:$0x1]
    %v167 = vld [vmem:[#allocation12] sm:$0xf]
    %v168 = vld [vmem:[#allocation12 + $0x4] sm:$0xf]
    %v169 = vld [vmem:[#allocation7] sm:$0xf]
    %v170 = vld [vmem:[#allocation7 + $0x4] sm:$0xf]
    %v171 = vld [vmem:[#allocation7 + $0x8] sm:$0xf]
    %v172 = vld [vmem:[#allocation7 + $0xc] sm:$0xf]
    %v173 = vld [vmem:[#allocation7 + $0x10] sm:$0xf]
    %v174 = vld [vmem:[#allocation7 + $0x14] sm:$0xf]
    %v175 = vld [vmem:[#allocation7 + $0x18] sm:$0xf]
    %v176 = vld [vmem:[#allocation7 + $0x1c] sm:$0xf]
    %v177 = vld [vmem:[#allocation7 + $0x20] sm:$0xf]
    %v178 = vld [vmem:[#allocation7 + $0x24] sm:$0xf]
    %v179 = vld [vmem:[#allocation7 + $0x28] sm:$0xf]
    %v180 = vld [vmem:[#allocation7 + $0x2c] sm:$0xf]
    %v181 = vld [vmem:[#allocation7 + $0x30] sm:$0xf]
    %v182 = vld [vmem:[#allocation7 + $0x34] sm:$0xf]
    %v183 = vld [vmem:[#allocation7 + $0x38] sm:$0xf]
    %v184 = vld [vmem:[#allocation7 + $0x3c] sm:$0xf]
    %v187 = vunpack.c.l.b16 %v167
    %v188 = vunpack.c.l.b16 %v168
    %v189 = vpack.c.b16 %v188, %v187
    %v207 = vunpack.c.l.b16 %v169
    %v208 = vunpack.c.l.b16 %v170
    %v209 = vunpack.c.l.b16 %v171
    %v210 = vunpack.c.l.b16 %v172
    %v211 = vunpack.c.l.b16 %v173
    %v212 = vunpack.c.l.b16 %v174
    %v213 = vunpack.c.l.b16 %v175
    %v214 = vunpack.c.l.b16 %v176
    %v215 = vunpack.c.l.b16 %v177
    %v216 = vunpack.c.l.b16 %v178
    %v217 = vunpack.c.l.b16 %v179
    %v218 = vunpack.c.l.b16 %v180
    %v219 = vunpack.c.l.b16 %v181
    %v220 = vunpack.c.l.b16 %v182
    %v221 = vunpack.c.l.b16 %v183
    %v222 = vunpack.c.l.b16 %v184
    %v223 = vpack.c.b16 %v208, %v207
    %v224 = vpack.c.b16 %v210, %v209
    %v225 = vpack.c.b16 %v212, %v211
    %v226 = vpack.c.b16 %v214, %v213
    %v227 = vpack.c.b16 %v216, %v215
    %v228 = vpack.c.b16 %v218, %v217
    %v229 = vpack.c.b16 %v220, %v219
    %v230 = vpack.c.b16 %v222, %v221
    %239 = vmatpush.bf16.msra.mxu0 %v230
    %240 = vmatpush.bf16.msra.mxu0 %v229
    %241 = vmatpush.bf16.msra.mxu0 %v228
    %242 = vmatpush.bf16.msra.mxu0 %v227
    %243 = vmatpush.bf16.msra.mxu0 %v226
    %244 = vmatpush.bf16.msra.mxu0 %v225
    %245 = vmatpush.bf16.msra.mxu0 %v224
    %246 = vmatpush.bf16.msra.mxu0 %v223
    %247 = vmatmul.bf16.gmra.mxu0 %v189
    %v248 = vpop.f32.mrf.mxu0
    %v249 = vadd.f32 0.0, %v248
    %v250 = vpop.f32.mrf.mxu0
    %v251 = vadd.f32 0.0, %v250
    %252 = vdwg.mxu0
    %v253 = vmax.f32 %v249, 0.0
    %v254 = vmax.f32 %v251, 0.0
    %v255 = vpack.c.bf16 %v254, %v253
    %v256 = vld [vmem:[#allocation9] sm:$0xf]
    %v257 = vld [vmem:[#allocation9 + $0x4] sm:$0xf]
    %v258 = vld [vmem:[#allocation9 + $0x8] sm:$0xf]
    %v259 = vld [vmem:[#allocation9 + $0xc] sm:$0xf]
    %v260 = vld [vmem:[#allocation9 + $0x10] sm:$0xf]
    %v261 = vld [vmem:[#allocation9 + $0x14] sm:$0xf]
    %v262 = vld [vmem:[#allocation9 + $0x18] sm:$0xf]
    %v263 = vld [vmem:[#allocation9 + $0x1c] sm:$0xf]
    %v264 = vld [vmem:[#allocation9 + $0x20] sm:$0xf]
    %v265 = vld [vmem:[#allocation9 + $0x24] sm:$0xf]
    %v266 = vld [vmem:[#allocation9 + $0x28] sm:$0xf]
    %v267 = vld [vmem:[#allocation9 + $0x2c] sm:$0xf]
    %v268 = vld [vmem:[#allocation9 + $0x30] sm:$0xf]
    %v269 = vld [vmem:[#allocation9 + $0x34] sm:$0xf]
    %v270 = vld [vmem:[#allocation9 + $0x38] sm:$0xf]
    %v271 = vld [vmem:[#allocation9 + $0x3c] sm:$0xf]
    %v272 = vperm.slane %v165, 0
    %v289 = vunpack.c.l.b16 %v256
    %v290 = vunpack.c.l.b16 %v257
    %v291 = vunpack.c.l.b16 %v258
    %v292 = vunpack.c.l.b16 %v259
    %v293 = vunpack.c.l.b16 %v260
    %v294 = vunpack.c.l.b16 %v261
    %v295 = vunpack.c.l.b16 %v262
    %v296 = vunpack.c.l.b16 %v263
    %v297 = vunpack.c.l.b16 %v264
    %v298 = vunpack.c.l.b16 %v265
    %v299 = vunpack.c.l.b16 %v266
    %v300 = vunpack.c.l.b16 %v267
    %v301 = vunpack.c.l.b16 %v268
    %v302 = vunpack.c.l.b16 %v269
    %v303 = vunpack.c.l.b16 %v270
    %v304 = vunpack.c.l.b16 %v271
    %v305 = vpack.c.b16 %v290, %v289
    %v306 = vpack.c.b16 %v292, %v291
    %v307 = vpack.c.b16 %v294, %v293
    %v308 = vpack.c.b16 %v296, %v295
    %v309 = vpack.c.b16 %v298, %v297
    %v310 = vpack.c.b16 %v300, %v299
    %v311 = vpack.c.b16 %v302, %v301
    %v312 = vpack.c.b16 %v304, %v303
    %321 = vmatpush.bf16.msra.mxu0 %v312
    %322 = vmatpush.bf16.msra.mxu0 %v311
    %323 = vmatpush.bf16.msra.mxu0 %v310
    %324 = vmatpush.bf16.msra.mxu0 %v309
    %325 = vmatpush.bf16.msra.mxu0 %v308
    %326 = vmatpush.bf16.msra.mxu0 %v307
    %327 = vmatpush.bf16.msra.mxu0 %v306
    %328 = vmatpush.bf16.msra.mxu0 %v305
    %329 = vmatmul.bf16.gmra.mxu0 %v255
    %v330 = vpop.f32.mrf.mxu0
    %v331 = vadd.f32 %v272, %v330
    %v332 = vpop.f32.mrf.mxu0
    %v333 = vadd.f32 %v272, %v332
    %334 = vdwg.mxu0
    %v335 = vmax.f32 %v331, 0.0
    %v336 = vmax.f32 %v333, 0.0
    %v337 = vpack.c.bf16 %v336, %v335
    %v338 = vld [vmem:[#allocation11] sm:$0xf]
    %v339 = vld [vmem:[#allocation11 + $0x4] sm:$0xf]
    %v340 = vld [vmem:[#allocation11 + $0x8] sm:$0xf]
    %v341 = vld [vmem:[#allocation11 + $0xc] sm:$0xf]
    %v342 = vld [vmem:[#allocation11 + $0x10] sm:$0xf]
    %v343 = vld [vmem:[#allocation11 + $0x14] sm:$0xf]
    %v344 = vld [vmem:[#allocation11 + $0x18] sm:$0xf]
    %v345 = vld [vmem:[#allocation11 + $0x1c] sm:$0xf]
    %v346 = vld [vmem:[#allocation11 + $0x20] sm:$0xf]
    %v347 = vld [vmem:[#allocation11 + $0x24] sm:$0xf]
    %v348 = vld [vmem:[#allocation11 + $0x28] sm:$0xf]
    %v349 = vld [vmem:[#allocation11 + $0x2c] sm:$0xf]
    %v350 = vld [vmem:[#allocation11 + $0x30] sm:$0xf]
    %v351 = vld [vmem:[#allocation11 + $0x34] sm:$0xf]
    %v352 = vld [vmem:[#allocation11 + $0x38] sm:$0xf]
    %v353 = vld [vmem:[#allocation11 + $0x3c] sm:$0xf]
    %v354 = vperm.slane %v166, 0
    %v371 = vunpack.c.l.b16 %v338
    %v372 = vunpack.c.l.b16 %v339
    %v373 = vunpack.c.l.b16 %v340
    %v374 = vunpack.c.l.b16 %v341
    %v375 = vunpack.c.l.b16 %v342
    %v376 = vunpack.c.l.b16 %v343
    %v377 = vunpack.c.l.b16 %v344
    %v378 = vunpack.c.l.b16 %v345
    %v379 = vunpack.c.l.b16 %v346
    %v380 = vunpack.c.l.b16 %v347
    %v381 = vunpack.c.l.b16 %v348
    %v382 = vunpack.c.l.b16 %v349
    %v383 = vunpack.c.l.b16 %v350
    %v384 = vunpack.c.l.b16 %v351
    %v385 = vunpack.c.l.b16 %v352
    %v386 = vunpack.c.l.b16 %v353
    %v387 = vpack.c.b16 %v372, %v371
    %v388 = vpack.c.b16 %v374, %v373
    %v389 = vpack.c.b16 %v376, %v375
    %v390 = vpack.c.b16 %v378, %v377
    %v391 = vpack.c.b16 %v380, %v379
    %v392 = vpack.c.b16 %v382, %v381
    %v393 = vpack.c.b16 %v384, %v383
    %v394 = vpack.c.b16 %v386, %v385
    %403 = vmatpush.bf16.msra.mxu0 %v394
    %404 = vmatpush.bf16.msra.mxu0 %v393
    %405 = vmatpush.bf16.msra.mxu0 %v392
    %406 = vmatpush.bf16.msra.mxu0 %v391
    %407 = vmatpush.bf16.msra.mxu0 %v390
    %408 = vmatpush.bf16.msra.mxu0 %v389
    %409 = vmatpush.bf16.msra.mxu0 %v388
    %410 = vmatpush.bf16.msra.mxu0 %v387
    %411 = vmatmul.bf16.gmra.mxu0 %v337
    %v412 = vpop.f32.mrf.mxu0
    %v413 = vadd.f32 %v354, %v412
    %v414 = vpop.f32.mrf.mxu0
    %v415 = vadd.f32 %v354, %v414
    %416 = vdwg.mxu0
    %v417 = vpack.c.bf16 %v413, %v413
    %v418 = vpack.c.bf16 %v415, %v415
    %419 = vst [vmem:[%s9] sm:$0xf] %v417
    %420 = vst [vmem:[%s9 + $0x4] sm:$0xf] %v418
    // Predicated region
    $region34: #{dqn_forward.2} parent=1 // pred_check
      _
    $region35: #{dqn_forward.2} parent=1 // pred_check_branch
      %422 = sbr.rel (0) target = $region37
    $region36: #{dqn_forward.2} parent=1 // pred_region
      _
    $region37: #{dqn_forward.2} parent=1 // pred_fallthru
      _
    // Predicated region
    $region38: #{dqn_forward.2} parent=1 // pred_check
      _
    $region39: #{dqn_forward.2} parent=1 // pred_check_branch
      %424 = sbr.rel (0) target = $region41
    $region40: #{dqn_forward.2} parent=1 // pred_region
      _
    $region41: #{dqn_forward.2} parent=1 // pred_fallthru
      _
    %425 = vsyncpa [#allocation8], 1
    %426 = vsyncpa [#allocation10], 1

</llo_original>
